<compile_context>
chip_gen: v7x
topology: tpu7x:2x2x1
jax: 0.10.0
libtpu: 0.0.40
codegen_flags: <defaults>
</compile_context>

<pallas_src>
import functools

import jax
import jax.numpy as jnp
from jax.experimental import pallas as pl
from jax.experimental.pallas import tpu as pltpu


def _leaky_relu(x, slope=0.01):
    return jnp.where(x >= 0, x, slope * x)


def _forward_tile(x, w1, wh, wout, b_all, *, hidden, val_size, adv_size, action_size):
    """Shared per-tile forward: returns (value (rows,1), advantage (rows,act))."""
    H = hidden
    VA = val_size + adv_size

    # bias slab rows: 0 = b1, 1 = b2, 2 = [bv1|ba1], 3 = [bv2|ba2]
    b1 = b_all[0:1, :H]
    b2 = b_all[1:2, :H]
    bva1 = b_all[2:3, :VA]
    bva2 = b_all[3:4, :1 + action_size]

    # shared trunk: fc1 + fc2
    h = _leaky_relu(jnp.dot(x, w1, preferred_element_type=jnp.float32) + b1)
    h = _leaky_relu(jnp.dot(h, wh[:, :H], preferred_element_type=jnp.float32) + b2)

    # fused value/advantage first layers (one MXU push instead of two)
    va = _leaky_relu(
        jnp.dot(h, wh[:, H:H + VA], preferred_element_type=jnp.float32) + bva1)

    # fused second layers via block-diagonal weight: col 0 = value, cols 1: = advantage
    vo = jnp.dot(va, wout, preferred_element_type=jnp.float32) + bva2
    v = vo[:, 0:1]
    a = vo[:, 1:1 + action_size]
    return v, a


def _duel_q_kernel_single(state_ref, w1_ref, wh_ref, wout_ref, bias_ref, out_ref,
                          *, hidden, val_size, adv_size, action_size):
    v, a = _forward_tile(
        state_ref[...], w1_ref[...], wh_ref[...], wout_ref[...], bias_ref[...],
        hidden=hidden, val_size=val_size, adv_size=adv_size, action_size=action_size)
    # PyTorch .mean() with no dim: scalar mean over the whole (B, action) tensor.
    a_mean = jnp.mean(a)
    out_ref[...] = (v + a - a_mean).astype(out_ref.dtype)


def _duel_q_kernel_tiled(state_ref, w1_ref, wh_ref, wout_ref, bias_ref, out_ref,
                         asum_ref,
                         *, inv_total, hidden, val_size, adv_size, action_size):
    # grid = (2, num_batch_tiles): pass 0 accumulates the global advantage sum,
    # pass 1 recomputes the (cheap) tile and writes the final result.
    p = pl.program_id(0)
    i = pl.program_id(1)

    @pl.when((p == 0) & (i == 0))
    def _():
        asum_ref[...] = jnp.zeros_like(asum_ref)

    v, a = _forward_tile(
        state_ref[...], w1_ref[...], wh_ref[...], wout_ref[...], bias_ref[...],
        hidden=hidden, val_size=val_size, adv_size=adv_size, action_size=action_size)

    @pl.when(p == 0)
    def _():
        asum_ref[...] += jnp.sum(a, keepdims=True)
        out_ref[...] = (v + a).astype(out_ref.dtype)   # provisional; rewritten in pass 1

    @pl.when(p == 1)
    def _():
        a_mean = asum_ref[...] * inv_total             # (1, 1) broadcasts
        out_ref[...] = (v + a - a_mean).astype(out_ref.dtype)


def pack_params(p):
    """Pack the 12 tiny parameter tensors into 4 operands (plus w1)."""
    H = p["w2"].shape[0]
    V = p["wv1"].shape[1]
    A = p["wa1"].shape[1]
    act = p["wa2"].shape[1]

    # same-fan-in weights into one slab: (H, H + V + A)
    w_h = jnp.concatenate([p["w2"], p["wv1"], p["wa1"]], axis=1)

    # block-diagonal second-layer weight: (V + A, 1 + act); zeros off-diagonal.
    w_out = jnp.zeros((V + A, 1 + act), jnp.float32)
    w_out = w_out.at[:V, 0:1].set(p["wv2"])
    w_out = w_out.at[V:, 1:].set(p["wa2"])

    # bias slab (4 rows, lane-padded to a common width)
    bw = max(H, V + A, 1 + act)
    pad = lambda r: jnp.pad(r, ((0, 0), (0, bw - r.shape[1])))
    bias = jnp.concatenate([
        pad(p["b1"]),
        pad(p["b2"]),
        pad(jnp.concatenate([p["bv1"], p["ba1"]], axis=1)),
        pad(jnp.concatenate([p["bv2"], p["ba2"]], axis=1)),
    ], axis=0)
    return w_h, w_out, bias


def duel_q_forward(state, params, *, batch_tile=None):
    """state: (B, state_size) f32; params: dict of (in,out) weights / (1,out) biases.

    batch_tile=None (or B not a multiple of it): single fused block, whole
    batch resident in VMEM (correct global mean, minimal launch/DMA overhead).
    batch_tile=TB with B % TB == 0 and B > TB: batch-tiled grid with resident
    weights and a two-pass global-mean reduction.
    """
    B, state_size = state.shape
    H = params["w1"].shape[1]
    V = params["wv1"].shape[1]
    A = params["wa1"].shape[1]
    act = params["wa2"].shape[1]

    w1 = params["w1"]
    w_h, w_out, bias = pack_params(params)
    out_shape = jax.ShapeDtypeStruct((B, act), jnp.float32)

    if batch_tile is None or B <= batch_tile or B % batch_tile != 0:
        kernel = functools.partial(
            _duel_q_kernel_single,
            hidden=H, val_size=V, adv_size=A, action_size=act)
        return pl.pallas_call(
            kernel,
            out_shape=out_shape,
            in_specs=[pl.BlockSpec(memory_space=pltpu.MemorySpace.VMEM)
                      for _ in range(5)],
            out_specs=pl.BlockSpec(memory_space=pltpu.MemorySpace.VMEM),
        )(state, w1, w_h, w_out, bias)

    TB = batch_tile
    kernel = functools.partial(
        _duel_q_kernel_tiled,
        inv_total=1.0 / float(B * act),
        hidden=H, val_size=V, adv_size=A, action_size=act)
    return pl.pallas_call(
        kernel,
        out_shape=out_shape,
        grid=(2, B // TB),
        in_specs=[
            pl.BlockSpec((TB, state_size), lambda p, i: (i, 0)),
            pl.BlockSpec(w1.shape, lambda p, i: (0, 0)),     # resident weights:
            pl.BlockSpec(w_h.shape, lambda p, i: (0, 0)),    # constant index_map
            pl.BlockSpec(w_out.shape, lambda p, i: (0, 0)),  # -> not re-DMA'd
            pl.BlockSpec(bias.shape, lambda p, i: (0, 0)),
        ],
        out_specs=pl.BlockSpec((TB, act), lambda p, i: (i, 0)),
        scratch_shapes=[pltpu.VMEM((1, 1), jnp.float32)],
        # NOTE: the global advantage mean couples every batch tile, so both grid
        # axes must stay sequential ("arbitrary"); a "parallel" batch axis would
        # split the sum accumulator across megacore TCs and change results.
        compiler_params=pltpu.CompilerParams(
            dimension_semantics=("arbitrary", "arbitrary")),
    )(state, w1, w_h, w_out, bias)


def init_params(key, state_size, action_size, hidden, val_size, adv_size):
    """nn.Linear-style init; weights stored transposed as (in, out)."""
    def linear(key, fan_in, fan_out):
        kw, kb = jax.random.split(key)
        bound = 1.0 / jnp.sqrt(fan_in)
        w = jax.random.uniform(kw, (fan_in, fan_out), jnp.float32, -bound, bound)
        b = jax.random.uniform(kb, (1, fan_out), jnp.float32, -bound, bound)
        return w, b

    keys = jax.random.split(key, 6)
    w1, b1 = linear(keys[0], state_size, hidden)
    w2, b2 = linear(keys[1], hidden, hidden)
    wv1, bv1 = linear(keys[2], hidden, val_size)
    wv2, bv2 = linear(keys[3], val_size, 1)
    wa1, ba1 = linear(keys[4], hidden, adv_size)
    wa2, ba2 = linear(keys[5], adv_size, action_size)
    return dict(w1=w1, b1=b1, w2=w2, b2=b2,
                wv1=wv1, bv1=bv1, wv2=wv2, bv2=bv2,
                wa1=wa1, ba1=ba1, wa2=wa2, ba2=ba2)


def _reference(state, p):
    """Pure-JAX reference of the PyTorch forward (uses the unpacked params)."""
    lr = lambda x: jnp.where(x >= 0, x, 0.01 * x)
    h = lr(state @ p["w1"] + p["b1"])
    h = lr(h @ p["w2"] + p["b2"])
    v = lr(h @ p["wv1"] + p["bv1"]) @ p["wv2"] + p["bv2"]
    a = lr(h @ p["wa1"] + p["ba1"]) @ p["wa2"] + p["ba2"]
    return v + a - jnp.mean(a)


if __name__ == "__main__":
    state_size = 16
    action_size = 4
    hidden = 32
    val_size = 32
    adv_size = 32

    key = jax.random.PRNGKey(0)
    k_params, k_s1, k_s2 = jax.random.split(key, 3)
    params = init_params(k_params, state_size, action_size, hidden, val_size, adv_size)

    # 1) small batch: single fused block (grid=()), whole problem in VMEM.
    B = 8
    state = jax.random.normal(k_s1, (B, state_size), jnp.float32)
    out = jax.block_until_ready(duel_q_forward(state, params))
    ref = _reference(state, params)
    assert out.shape == (B, action_size)
    assert jnp.allclose(out, ref, atol=1e-4, rtol=1e-4), "single-block mismatch"

    # 2) training-sized batch: batch-tiled grid, resident weights, two-pass
    #    global-mean reduction (128-row tiles; use 256 on v6e/v7x for full MXU rows).
    B2, TB = 256, 128
    state2 = jax.random.normal(k_s2, (B2, state_size), jnp.float32)
    out2 = jax.block_until_ready(duel_q_forward(state2, params, batch_tile=TB))
    ref2 = _reference(state2, params)
    assert out2.shape == (B2, action_size)
    assert jnp.allclose(out2, ref2, atol=1e-4, rtol=1e-4), "tiled mismatch"

    print("KERNEL_OK")
</pallas_src>

<mosaic_0001>
module attributes {stable_mosaic.version = 11 : i64} {
  func.func @_duel_q_kernel_single(%arg0: memref<8x16xf32, #tpu.memory_space<vmem>>, %arg1: memref<16x32xf32, #tpu.memory_space<vmem>>, %arg2: memref<32x96xf32, #tpu.memory_space<vmem>>, %arg3: memref<64x5xf32, #tpu.memory_space<vmem>>, %arg4: memref<4x64xf32, #tpu.memory_space<vmem>>, %arg5: memref<8x4xf32, #tpu.memory_space<vmem>>) attributes {dimension_semantics = [], scalar_prefetch = 0 : i64, scratch_operands = 0 : i64, tpu.core_type = #tpu.core_type<tc>} {
    %c0 = arith.constant 0 : index
    %c0_0 = arith.constant 0 : index
    %0 = vector.load %arg0[%c0, %c0_0] : memref<8x16xf32, #tpu.memory_space<vmem>>, vector<8x16xf32>
    %c0_1 = arith.constant 0 : index
    %c0_2 = arith.constant 0 : index
    %1 = vector.load %arg1[%c0_1, %c0_2] : memref<16x32xf32, #tpu.memory_space<vmem>>, vector<16x32xf32>
    %c0_3 = arith.constant 0 : index
    %c0_4 = arith.constant 0 : index
    %2 = vector.load %arg2[%c0_3, %c0_4] : memref<32x96xf32, #tpu.memory_space<vmem>>, vector<32x96xf32>
    %c0_5 = arith.constant 0 : index
    %c0_6 = arith.constant 0 : index
    %3 = vector.load %arg3[%c0_5, %c0_6] : memref<64x5xf32, #tpu.memory_space<vmem>>, vector<64x5xf32>
    %c0_7 = arith.constant 0 : index
    %c0_8 = arith.constant 0 : index
    %4 = vector.load %arg4[%c0_7, %c0_8] : memref<4x64xf32, #tpu.memory_space<vmem>>, vector<4x64xf32>
    %5 = vector.extract_strided_slice %4 {offsets = [0, 0], sizes = [1, 32], strides = [1, 1]} : vector<4x64xf32> to vector<1x32xf32>
    %6 = vector.extract_strided_slice %4 {offsets = [1, 0], sizes = [1, 32], strides = [1, 1]} : vector<4x64xf32> to vector<1x32xf32>
    %7 = vector.extract_strided_slice %4 {offsets = [2, 0], sizes = [1, 64], strides = [1, 1]} : vector<4x64xf32> to vector<1x64xf32>
    %8 = vector.extract_strided_slice %4 {offsets = [3, 0], sizes = [1, 5], strides = [1, 1]} : vector<4x64xf32> to vector<1x5xf32>
    %cst = arith.constant dense<0.000000e+00> : vector<8x32xf32>
    %9 = tpu.matmul %0, %1, %cst {dimension_numbers = #tpu.dot_dimension_numbers<[1], [0], [0], [1], [0, 0, 1, 1], [], []>} : vector<8x16xf32>, vector<16x32xf32>, vector<8x32xf32> -> vector<8x32xf32>
    %10 = vector.broadcast %5 : vector<1x32xf32> to vector<8x32xf32>
    %11 = arith.addf %9, %10 : vector<8x32xf32>
    %cst_9 = arith.constant 0.000000e+00 : f32
    %12 = vector.broadcast %cst_9 : f32 to vector<8x32xf32>
    %13 = arith.cmpf oge, %11, %12 : vector<8x32xf32>
    %cst_10 = arith.constant 0.00999999977 : f32
    %14 = vector.broadcast %cst_10 : f32 to vector<8x32xf32>
    %15 = arith.mulf %14, %11 : vector<8x32xf32>
    %16 = arith.select %13, %11, %15 : vector<8x32xi1>, vector<8x32xf32>
    %17 = vector.extract_strided_slice %2 {offsets = [0, 0], sizes = [32, 32], strides = [1, 1]} : vector<32x96xf32> to vector<32x32xf32>
    %cst_11 = arith.constant dense<0.000000e+00> : vector<8x32xf32>
    %18 = tpu.matmul %16, %17, %cst_11 {dimension_numbers = #tpu.dot_dimension_numbers<[1], [0], [0], [1], [0, 0, 1, 1], [], []>} : vector<8x32xf32>, vector<32x32xf32>, vector<8x32xf32> -> vector<8x32xf32>
    %19 = vector.broadcast %6 : vector<1x32xf32> to vector<8x32xf32>
    %20 = arith.addf %18, %19 : vector<8x32xf32>
    %cst_12 = arith.constant 0.000000e+00 : f32
    %21 = vector.broadcast %cst_12 : f32 to vector<8x32xf32>
    %22 = arith.cmpf oge, %20, %21 : vector<8x32xf32>
    %cst_13 = arith.constant 0.00999999977 : f32
    %23 = vector.broadcast %cst_13 : f32 to vector<8x32xf32>
    %24 = arith.mulf %23, %20 : vector<8x32xf32>
    %25 = arith.select %22, %20, %24 : vector<8x32xi1>, vector<8x32xf32>
    %26 = vector.extract_strided_slice %2 {offsets = [0, 32], sizes = [32, 64], strides = [1, 1]} : vector<32x96xf32> to vector<32x64xf32>
    %cst_14 = arith.constant dense<0.000000e+00> : vector<8x64xf32>
    %27 = tpu.matmul %25, %26, %cst_14 {dimension_numbers = #tpu.dot_dimension_numbers<[1], [0], [0], [1], [0, 0, 1, 1], [], []>} : vector<8x32xf32>, vector<32x64xf32>, vector<8x64xf32> -> vector<8x64xf32>
    %28 = vector.broadcast %7 : vector<1x64xf32> to vector<8x64xf32>
    %29 = arith.addf %27, %28 : vector<8x64xf32>
    %cst_15 = arith.constant 0.000000e+00 : f32
    %30 = vector.broadcast %cst_15 : f32 to vector<8x64xf32>
    %31 = arith.cmpf oge, %29, %30 : vector<8x64xf32>
    %cst_16 = arith.constant 0.00999999977 : f32
    %32 = vector.broadcast %cst_16 : f32 to vector<8x64xf32>
    %33 = arith.mulf %32, %29 : vector<8x64xf32>
    %34 = arith.select %31, %29, %33 : vector<8x64xi1>, vector<8x64xf32>
    %cst_17 = arith.constant dense<0.000000e+00> : vector<8x5xf32>
    %35 = tpu.matmul %34, %3, %cst_17 {dimension_numbers = #tpu.dot_dimension_numbers<[1], [0], [0], [1], [0, 0, 1, 1], [], []>} : vector<8x64xf32>, vector<64x5xf32>, vector<8x5xf32> -> vector<8x5xf32>
    %36 = vector.broadcast %8 : vector<1x5xf32> to vector<8x5xf32>
    %37 = arith.addf %35, %36 : vector<8x5xf32>
    %38 = vector.extract_strided_slice %37 {offsets = [0, 0], sizes = [8, 1], strides = [1, 1]} : vector<8x5xf32> to vector<8x1xf32>
    %39 = vector.extract_strided_slice %37 {offsets = [0, 1], sizes = [8, 4], strides = [1, 1]} : vector<8x5xf32> to vector<8x4xf32>
    %40 = vector.shape_cast %39 : vector<8x4xf32> to vector<1x8x4xf32>
    %cst_18 = arith.constant dense<0.000000e+00> : vector<1xf32>
    %41 = vector.multi_reduction <add>, %40, %cst_18 [1, 2] : vector<1x8x4xf32> to vector<1xf32>
    %42 = vector.shape_cast %41 : vector<1xf32> to vector<1x1x1xf32>
    %43 = vector.extract %42[0, 0, 0] : f32 from vector<1x1x1xf32>
    %cst_19 = arith.constant 3.200000e+01 : f32
    %44 = arith.divf %43, %cst_19 : f32
    %45 = vector.broadcast %38 : vector<8x1xf32> to vector<8x4xf32>
    %46 = arith.addf %45, %39 : vector<8x4xf32>
    %47 = vector.broadcast %44 : f32 to vector<8x4xf32>
    %48 = arith.subf %46, %47 : vector<8x4xf32>
    %c0_20 = arith.constant 0 : index
    %c0_21 = arith.constant 0 : index
    %49 = vector.load %arg5[%c0_20, %c0_21] : memref<8x4xf32, #tpu.memory_space<vmem>>, vector<8x4xf32>
    tpu.vector_store %arg5[%c0_20, %c0_21], %48 {strides = array<i32>} : memref<8x4xf32, #tpu.memory_space<vmem>>, vector<8x4xf32>,
    return
  }
}

</mosaic_0001>

<llo_original>
// kernel: tpu_custom_call.1
$region0: #{tpu_custom_call.1}
  #allocation0 [shape = 'u32[]', space=smem, size = 0x4, offset = 0x4, fixed_abs, tag = 'smem constant byte address 0x4 - core index']
  #allocation1 [shape = 'u32[144,128]{1,0:T(1,128)}', space=vmem, size = 0x12000, scoped, tag = 'internal scratch']
  %s0 = inlined_call_operand.vmem [shape: f32[8,16], index: 0, kind: input, shape index: {}]
  %s1 = inlined_call_operand.vmem [shape: f32[16,32], index: 1, kind: input, shape index: {}]
  %s2 = inlined_call_operand.vmem [shape: f32[32,96], index: 2, kind: input, shape index: {}]
  %s3 = inlined_call_operand.vmem [shape: f32[64,5], index: 3, kind: input, shape index: {}]
  %s4 = inlined_call_operand.vmem [shape: f32[4,64], index: 4, kind: input, shape index: {}]
  %s5 = inlined_call_operand.vmem [shape: f32[8,4], index: 5, kind: output, shape index: {}]
  %s6 = sld [smem:[#allocation0]]
  $region30: #{tpu_custom_call.1} parent=0
    _
  %s8 = ssub.s32 1, %s6
  %s9 = scalar_select 0, %s8, %s6
  // Predicated region
  $region2: #{tpu_custom_call.1} parent=0 // pred_check
    _
  $region3: #{tpu_custom_call.1} parent=0 // pred_check_branch
    %11 = sbr.rel (0) target = $region5
  $region4: #{tpu_custom_call.1} parent=0 // pred_region
    _
  $region5: #{tpu_custom_call.1} parent=0 // pred_fallthru
    _
  // Predicated region
  $region6: #{tpu_custom_call.1} parent=0 // pred_check
    _
  $region7: #{tpu_custom_call.1} parent=0 // pred_check_branch
    %13 = sbr.rel (0) target = $region9
  $region8: #{tpu_custom_call.1} parent=0 // pred_region
    _
  $region9: #{tpu_custom_call.1} parent=0 // pred_fallthru
    _
  // Predicated region
  $region10: #{tpu_custom_call.1} parent=0 // pred_check
    _
  $region11: #{tpu_custom_call.1} parent=0 // pred_check_branch
    %15 = sbr.rel (0) target = $region13
  $region12: #{tpu_custom_call.1} parent=0 // pred_region
    _
  $region13: #{tpu_custom_call.1} parent=0 // pred_fallthru
    _
  // Predicated region
  $region14: #{tpu_custom_call.1} parent=0 // pred_check
    _
  $region15: #{tpu_custom_call.1} parent=0 // pred_check_branch
    %17 = sbr.rel (0) target = $region17
  $region16: #{tpu_custom_call.1} parent=0 // pred_region
    _
  $region17: #{tpu_custom_call.1} parent=0 // pred_fallthru
    _
  // Predicated region
  $region18: #{tpu_custom_call.1} parent=0 // pred_check
    _
  $region19: #{tpu_custom_call.1} parent=0 // pred_check_branch
    %19 = sbr.rel (0) target = $region21
  $region20: #{tpu_custom_call.1} parent=0 // pred_region
    _
  $region21: #{tpu_custom_call.1} parent=0 // pred_fallthru
    _
  %v20 = vld [vmem:[%s0] sm:$0xff]
  %v21 = vld [vmem:[%s1] sm:$0xff]
  %v22 = vld [vmem:[%s1 + $0x8] sm:$0xff]
  %v23 = vld [vmem:[%s2] sm:$0xff]
  %v24 = vld [vmem:[%s2 + $0x8] sm:$0xff]
  %v25 = vld [vmem:[%s2 + $0x10] sm:$0xff]
  %v26 = vld [vmem:[%s2 + $0x18] sm:$0xff]
  %v27 = vld [vmem:[%s3] sm:$0xff]
  %v28 = vld [vmem:[%s3 + $0x8] sm:$0xff]
  %v29 = vld [vmem:[%s3 + $0x10] sm:$0xff]
  %v30 = vld [vmem:[%s3 + $0x18] sm:$0xff]
  %v31 = vld [vmem:[%s3 + $0x20] sm:$0xff]
  %v32 = vld [vmem:[%s3 + $0x28] sm:$0xff]
  %v33 = vld [vmem:[%s3 + $0x30] sm:$0xff]
  %v34 = vld [vmem:[%s3 + $0x38] sm:$0xff]
  %v35 = vld [vmem:[%s4] sm:$0xf]
  %v36 = vlaneseq
  %v37 = vshrl.u32 %v36, 7
  %v38 = vsub.s32 0, %v37
  %v39 = vrot.slane %v35, %v38
  %vm40 = vcmask 130048
  %v42 = vsel %vm40, %v20, 0
  %44 = vmatprep.subr.mxu0 0.0
  %45 = vmatpush1.msra.mxu0 %v21
  %46 = vmatprep.subr.mxu0 0.0
  %47 = vmatpush1.msra.mxu0 %v22
  %48 = vmatprep.subr.mxu0 0.0
  %49 = vmatpush1.msra.mxu0 0.0
  %50 = vmatprep.subr.mxu0 0.0
  %51 = vmatpush1.msra.mxu0 0.0
  %52 = vmatprep.subr.mxu0 0.0
  %53 = vmatpush1.msra.mxu0 0.0
  %54 = vmatprep.subr.mxu0 0.0
  %55 = vmatpush1.msra.mxu0 0.0
  %56 = vmatprep.subr.mxu0 0.0
  %57 = vmatpush1.msra.mxu0 0.0
  %58 = vmatprep.subr.mxu0 0.0
  %59 = vmatpush1.msra.mxu0 0.0
  %60 = vmatprep.subr.mxu0 0.0
  %61 = vmatpush1.msra.mxu0 0.0
  %62 = vmatprep.subr.mxu0 0.0
  %63 = vmatpush1.msra.mxu0 0.0
  %64 = vmatprep.subr.mxu0 0.0
  %65 = vmatpush1.msra.mxu0 0.0
  %66 = vmatprep.subr.mxu0 0.0
  %67 = vmatpush1.msra.mxu0 0.0
  %68 = vmatprep.subr.mxu0 0.0
  %69 = vmatpush1.msra.mxu0 0.0
  %70 = vmatprep.subr.mxu0 0.0
  %71 = vmatpush1.msra.mxu0 0.0
  %72 = vmatprep.subr.mxu0 0.0
  %73 = vmatpush1.msra.mxu0 0.0
  %74 = vmatprep.subr.mxu0 0.0
  %75 = vmatpush1.msra.mxu0 0.0
  %76 = vmatprep.subr.mxu0 0.0
  %77 = vmatpush1.msra.mxu0 0.0
  %78 = vmatprep.subr.mxu0 0.0
  %79 = vmatpush1.msra.mxu0 0.0
  %80 = vmatprep.subr.mxu0 0.0
  %81 = vmatpush1.msra.mxu0 0.0
  %82 = vmatprep.subr.mxu0 0.0
  %83 = vmatpush1.msra.mxu0 0.0
  %84 = vmatprep.subr.mxu0 0.0
  %85 = vmatpush1.msra.mxu0 0.0
  %86 = vmatprep.subr.mxu0 0.0
  %87 = vmatpush1.msra.mxu0 0.0
  %88 = vmatprep.subr.mxu0 0.0
  %89 = vmatpush1.msra.mxu0 0.0
  %90 = vmatprep.subr.mxu0 0.0
  %91 = vmatpush1.msra.mxu0 0.0
  %92 = vmatprep.subr.mxu0 0.0
  %93 = vmatpush1.msra.mxu0 0.0
  %94 = vmatprep.subr.mxu0 0.0
  %95 = vmatpush1.msra.mxu0 0.0
  %96 = vmatprep.subr.mxu0 0.0
  %97 = vmatpush1.msra.mxu0 0.0
  %98 = vmatprep.subr.mxu0 0.0
  %99 = vmatpush1.msra.mxu0 0.0
  %100 = vmatprep.subr.mxu0 0.0
  %101 = vmatpush1.msra.mxu0 0.0
  %102 = vmatprep.subr.mxu0 0.0
  %103 = vmatpush1.msra.mxu0 0.0
  %104 = vmatprep.subr.mxu0 0.0
  %105 = vmatpush1.msra.mxu0 0.0
  %106 = vmatprep.subr.mxu0 0.0
  %107 = vmatpush1.msra.mxu0 0.0
  %108 = vmatprep.mubr.f32.mxu0 0.0
  %109 = vmatmul.mubr.f32.gmra.mrb[0].mxu0 %v42
  %v110 = vpop.f32.mrb[0].mxu0
  %v111 = vadd.f32 %v39, %v110
  %v112 = vpop.f32.mrb[0].mxu0
  %113 = vdwg.mxu0
  %vm114 = vcmp.ge.f32.partialorder %v111, 0.0
  %v115 = vmul.f32 %v111, 0.01
  %v116 = vsel %vm114, %v111, %v115
  %v117 = vlaneseq
  %v118 = vshrl.u32 %v117, 7
  %v119 = vsub.s32 1, %v118
  %v120 = vrot.slane %v35, %v119
  %vm121 = vcmask 261120
  %v123 = vsel %vm121, %v116, 0
  %125 = vmatprep.subr.mxu0 0.0
  %126 = vmatpush1.msra.mxu0 %v23
  %127 = vmatprep.subr.mxu0 0.0
  %128 = vmatpush1.msra.mxu0 %v24
  %129 = vmatprep.subr.mxu0 0.0
  %130 = vmatpush1.msra.mxu0 %v25
  %131 = vmatprep.subr.mxu0 0.0
  %132 = vmatpush1.msra.mxu0 %v26
  %133 = vmatprep.subr.mxu0 0.0
  %134 = vmatpush1.msra.mxu0 0.0
  %135 = vmatprep.subr.mxu0 0.0
  %136 = vmatpush1.msra.mxu0 0.0
  %137 = vmatprep.subr.mxu0 0.0
  %138 = vmatpush1.msra.mxu0 0.0
  %139 = vmatprep.subr.mxu0 0.0
  %140 = vmatpush1.msra.mxu0 0.0
  %141 = vmatprep.subr.mxu0 0.0
  %142 = vmatpush1.msra.mxu0 0.0
  %143 = vmatprep.subr.mxu0 0.0
  %144 = vmatpush1.msra.mxu0 0.0
  %145 = vmatprep.subr.mxu0 0.0
  %146 = vmatpush1.msra.mxu0 0.0
  %147 = vmatprep.subr.mxu0 0.0
  %148 = vmatpush1.msra.mxu0 0.0
  %149 = vmatprep.subr.mxu0 0.0
  %150 = vmatpush1.msra.mxu0 0.0
  %151 = vmatprep.subr.mxu0 0.0
  %152 = vmatpush1.msra.mxu0 0.0
  %153 = vmatprep.subr.mxu0 0.0
  %154 = vmatpush1.msra.mxu0 0.0
  %155 = vmatprep.subr.mxu0 0.0
  %156 = vmatpush1.msra.mxu0 0.0
  %157 = vmatprep.subr.mxu0 0.0
  %158 = vmatpush1.msra.mxu0 0.0
  %159 = vmatprep.subr.mxu0 0.0
  %160 = vmatpush1.msra.mxu0 0.0
  %161 = vmatprep.subr.mxu0 0.0
  %162 = vmatpush1.msra.mxu0 0.0
  %163 = vmatprep.subr.mxu0 0.0
  %164 = vmatpush1.msra.mxu0 0.0
  %165 = vmatprep.subr.mxu0 0.0
  %166 = vmatpush1.msra.mxu0 0.0
  %167 = vmatprep.subr.mxu0 0.0
  %168 = vmatpush1.msra.mxu0 0.0
  %169 = vmatprep.subr.mxu0 0.0
  %170 = vmatpush1.msra.mxu0 0.0
  %171 = vmatprep.subr.mxu0 0.0
  %172 = vmatpush1.msra.mxu0 0.0
  %173 = vmatprep.subr.mxu0 0.0
  %174 = vmatpush1.msra.mxu0 0.0
  %175 = vmatprep.subr.mxu0 0.0
  %176 = vmatpush1.msra.mxu0 0.0
  %177 = vmatprep.subr.mxu0 0.0
  %178 = vmatpush1.msra.mxu0 0.0
  %179 = vmatprep.subr.mxu0 0.0
  %180 = vmatpush1.msra.mxu0 0.0
  %181 = vmatprep.subr.mxu0 0.0
  %182 = vmatpush1.msra.mxu0 0.0
  %183 = vmatprep.subr.mxu0 0.0
  %184 = vmatpush1.msra.mxu0 0.0
  %185 = vmatprep.subr.mxu0 0.0
  %186 = vmatpush1.msra.mxu0 0.0
  %187 = vmatprep.subr.mxu0 0.0
  %188 = vmatpush1.msra.mxu0 0.0
  %189 = vmatprep.mubr.f32.mxu0 0.0
  %190 = vmatmul.mubr.f32.gmra.mrb[0].mxu0 %v123
  %v191 = vpop.f32.mrb[0].mxu0
  %v192 = vadd.f32 %v120, %v191
  %v193 = vpop.f32.mrb[0].mxu0
  %194 = vdwg.mxu0
  %vm195 = vcmp.ge.f32.partialorder %v192, 0.0
  %v196 = vmul.f32 %v192, 0.01
  %v197 = vsel %vm195, %v192, %v196
  %v198 = vlaneseq
  %v199 = vshrl.u32 %v198, 7
  %v200 = vsub.s32 2, %v199
  %v201 = vrot.slane %v35, %v200
  %206 = vrot.lane.b32.xlu0 %v23, 96
  %v207 = vpop.permute.xlu0 %206
  %208 = vrot.lane.b32.xlu0 %v24, 96
  %v209 = vpop.permute.xlu0 %208
  %210 = vrot.lane.b32.xlu0 %v25, 96
  %v211 = vpop.permute.xlu0 %210
  %212 = vrot.lane.b32.xlu0 %v26, 96
  %v213 = vpop.permute.xlu0 %212
  %v219 = vsel %vm121, %v197, 0
  %221 = vmatprep.subr.mxu0 0.0
  %222 = vmatpush1.msra.mxu0 %v207
  %223 = vmatprep.subr.mxu0 0.0
  %224 = vmatpush1.msra.mxu0 %v209
  %225 = vmatprep.subr.mxu0 0.0
  %226 = vmatpush1.msra.mxu0 %v211
  %227 = vmatprep.subr.mxu0 0.0
  %228 = vmatpush1.msra.mxu0 %v213
  %229 = vmatprep.subr.mxu0 0.0
  %230 = vmatpush1.msra.mxu0 0.0
  %231 = vmatprep.subr.mxu0 0.0
  %232 = vmatpush1.msra.mxu0 0.0
  %233 = vmatprep.subr.mxu0 0.0
  %234 = vmatpush1.msra.mxu0 0.0
  %235 = vmatprep.subr.mxu0 0.0
  %236 = vmatpush1.msra.mxu0 0.0
  %237 = vmatprep.subr.mxu0 0.0
  %238 = vmatpush1.msra.mxu0 0.0
  %239 = vmatprep.subr.mxu0 0.0
  %240 = vmatpush1.msra.mxu0 0.0
  %241 = vmatprep.subr.mxu0 0.0
  %242 = vmatpush1.msra.mxu0 0.0
  %243 = vmatprep.subr.mxu0 0.0
  %244 = vmatpush1.msra.mxu0 0.0
  %245 = vmatprep.subr.mxu0 0.0
  %246 = vmatpush1.msra.mxu0 0.0
  %247 = vmatprep.subr.mxu0 0.0
  %248 = vmatpush1.msra.mxu0 0.0
  %249 = vmatprep.subr.mxu0 0.0
  %250 = vmatpush1.msra.mxu0 0.0
  %251 = vmatprep.subr.mxu0 0.0
  %252 = vmatpush1.msra.mxu0 0.0
  %253 = vmatprep.subr.mxu0 0.0
  %254 = vmatpush1.msra.mxu0 0.0
  %255 = vmatprep.subr.mxu0 0.0
  %256 = vmatpush1.msra.mxu0 0.0
  %257 = vmatprep.subr.mxu0 0.0
  %258 = vmatpush1.msra.mxu0 0.0
  %259 = vmatprep.subr.mxu0 0.0
  %260 = vmatpush1.msra.mxu0 0.0
  %261 = vmatprep.subr.mxu0 0.0
  %262 = vmatpush1.msra.mxu0 0.0
  %263 = vmatprep.subr.mxu0 0.0
  %264 = vmatpush1.msra.mxu0 0.0
  %265 = vmatprep.subr.mxu0 0.0
  %266 = vmatpush1.msra.mxu0 0.0
  %267 = vmatprep.subr.mxu0 0.0
  %268 = vmatpush1.msra.mxu0 0.0
  %269 = vmatprep.subr.mxu0 0.0
  %270 = vmatpush1.msra.mxu0 0.0
  %271 = vmatprep.subr.mxu0 0.0
  %272 = vmatpush1.msra.mxu0 0.0
  %273 = vmatprep.subr.mxu0 0.0
  %274 = vmatpush1.msra.mxu0 0.0
  %275 = vmatprep.subr.mxu0 0.0
  %276 = vmatpush1.msra.mxu0 0.0
  %277 = vmatprep.subr.mxu0 0.0
  %278 = vmatpush1.msra.mxu0 0.0
  %279 = vmatprep.subr.mxu0 0.0
  %280 = vmatpush1.msra.mxu0 0.0
  %281 = vmatprep.subr.mxu0 0.0
  %282 = vmatpush1.msra.mxu0 0.0
  %283 = vmatprep.subr.mxu0 0.0
  %284 = vmatpush1.msra.mxu0 0.0
  %285 = vmatprep.mubr.f32.mxu0 0.0
  %286 = vmatmul.mubr.f32.gmra.mrb[0].mxu0 %v219
  %v287 = vpop.f32.mrb[0].mxu0
  %v288 = vadd.f32 %v201, %v287
  %v289 = vpop.f32.mrb[0].mxu0
  %290 = vdwg.mxu0
  %vm291 = vcmp.ge.f32.partialorder %v288, 0.0
  %v292 = vmul.f32 %v288, 0.01
  %v293 = vsel %vm291, %v288, %v292
  %v294 = vlaneseq
  %v295 = vshrl.u32 %v294, 7
  %v296 = vsub.s32 3, %v295
  %v297 = vrot.slane %v35, %v296
  %vm298 = vcmask 523264
  %v300 = vsel %vm298, %v293, 0
  %302 = vmatprep.subr.mxu0 0.0
  %303 = vmatpush1.msra.mxu0 %v27
  %304 = vmatprep.subr.mxu0 0.0
  %305 = vmatpush1.msra.mxu0 %v28
  %306 = vmatprep.subr.mxu0 0.0
  %307 = vmatpush1.msra.mxu0 %v29
  %308 = vmatprep.subr.mxu0 0.0
  %309 = vmatpush1.msra.mxu0 %v30
  %310 = vmatprep.subr.mxu0 0.0
  %311 = vmatpush1.msra.mxu0 %v31
  %312 = vmatprep.subr.mxu0 0.0
  %313 = vmatpush1.msra.mxu0 %v32
  %314 = vmatprep.subr.mxu0 0.0
  %315 = vmatpush1.msra.mxu0 %v33
  %316 = vmatprep.subr.mxu0 0.0
  %317 = vmatpush1.msra.mxu0 %v34
  %318 = vmatprep.subr.mxu0 0.0
  %319 = vmatpush1.msra.mxu0 0.0
  %320 = vmatprep.subr.mxu0 0.0
  %321 = vmatpush1.msra.mxu0 0.0
  %322 = vmatprep.subr.mxu0 0.0
  %323 = vmatpush1.msra.mxu0 0.0
  %324 = vmatprep.subr.mxu0 0.0
  %325 = vmatpush1.msra.mxu0 0.0
  %326 = vmatprep.subr.mxu0 0.0
  %327 = vmatpush1.msra.mxu0 0.0
  %328 = vmatprep.subr.mxu0 0.0
  %329 = vmatpush1.msra.mxu0 0.0
  %330 = vmatprep.subr.mxu0 0.0
  %331 = vmatpush1.msra.mxu0 0.0
  %332 = vmatprep.subr.mxu0 0.0
  %333 = vmatpush1.msra.mxu0 0.0
  %334 = vmatprep.subr.mxu0 0.0
  %335 = vmatpush1.msra.mxu0 0.0
  %336 = vmatprep.subr.mxu0 0.0
  %337 = vmatpush1.msra.mxu0 0.0
  %338 = vmatprep.subr.mxu0 0.0
  %339 = vmatpush1.msra.mxu0 0.0
  %340 = vmatprep.subr.mxu0 0.0
  %341 = vmatpush1.msra.mxu0 0.0
  %342 = vmatprep.subr.mxu0 0.0
  %343 = vmatpush1.msra.mxu0 0.0
  %344 = vmatprep.subr.mxu0 0.0
  %345 = vmatpush1.msra.mxu0 0.0
  %346 = vmatprep.subr.mxu0 0.0
  %347 = vmatpush1.msra.mxu0 0.0
  %348 = vmatprep.subr.mxu0 0.0
  %349 = vmatpush1.msra.mxu0 0.0
  %350 = vmatprep.subr.mxu0 0.0
  %351 = vmatpush1.msra.mxu0 0.0
  %352 = vmatprep.subr.mxu0 0.0
  %353 = vmatpush1.msra.mxu0 0.0
  %354 = vmatprep.subr.mxu0 0.0
  %355 = vmatpush1.msra.mxu0 0.0
  %356 = vmatprep.subr.mxu0 0.0
  %357 = vmatpush1.msra.mxu0 0.0
  %358 = vmatprep.subr.mxu0 0.0
  %359 = vmatpush1.msra.mxu0 0.0
  %360 = vmatprep.subr.mxu0 0.0
  %361 = vmatpush1.msra.mxu0 0.0
  %362 = vmatprep.subr.mxu0 0.0
  %363 = vmatpush1.msra.mxu0 0.0
  %364 = vmatprep.subr.mxu0 0.0
  %365 = vmatpush1.msra.mxu0 0.0
  %366 = vmatprep.mubr.f32.mxu0 0.0
  %367 = vmatmul.mubr.f32.gmra.mrb[0].mxu0 %v300
  %v368 = vpop.f32.mrb[0].mxu0
  %v369 = vadd.f32 %v297, %v368
  %v370 = vpop.f32.mrb[0].mxu0
  %371 = vdwg.mxu0
  %373 = vrot.lane.b32.xlu0 %v369, 127
  %v374 = vpop.permute.xlu0 %373
  %vm376 = vcmask 31744
  %v377 = vsel %vm376, %v374, 0.0
  %378 = vadd.xlane.f32.xlu0 %v377
  %v379 = vpop.xlane.xlu0 %378
  %v380 = vrot.slane %v379, 4
  %v381 = vadd.f32 %v379, %v380
  %v382 = vrot.slane %v381, 2
  %v383 = vadd.f32 %v381, %v382
  %v384 = vrot.slane %v383, 1
  %v385 = vadd.f32 %v383, %v384
  %s386 = vtos %v385
  %v387 = vrcp.pop 32.0
  %s388 = vtos %v387
  %s389 = smul.f32 %s386, %s388
  %390 = vset.pattern.permute.xlu0 0
  %391 = vperm.xlu0 %390, %v369
  %v392 = vpop.permute.xlu0 %391
  %v394 = vadd.f32 %v392, %v369
  %v395 = vstv %s389
  %v396 = vsub.f32 %v394, %v395
  %398 = vrot.lane.b32.xlu0 %v396, 127
  %v399 = vpop.permute.xlu0 %398
  %401 = vst.msk [vmem:[%s5] sm:$0xff] %vm376, %v399
  // Predicated region
  $region22: #{tpu_custom_call.1} parent=0 // pred_check
    _
  $region23: #{tpu_custom_call.1} parent=0 // pred_check_branch
    %403 = sbr.rel (0) target = $region25
  $region24: #{tpu_custom_call.1} parent=0 // pred_region
    _
  $region25: #{tpu_custom_call.1} parent=0 // pred_fallthru
    _
  // Predicated region
  $region26: #{tpu_custom_call.1} parent=0 // pred_check
    _
  $region27: #{tpu_custom_call.1} parent=0 // pred_check_branch
    %405 = sbr.rel (0) target = $region29
  $region28: #{tpu_custom_call.1} parent=0 // pred_region
    _
  $region29: #{tpu_custom_call.1} parent=0 // pred_fallthru
    _

</llo_original>
